<compile_context>
chip_gen: v5e
topology: v5e:2x2
jax: 0.10.0
libtpu: 0.0.40
codegen_flags: <defaults>
</compile_context>

<pallas_src>
import functools

import jax
import jax.numpy as jnp
from jax.experimental import pallas as pl
from jax.experimental.pallas import tpu as pltpu

LANE = 128


def _round_up(n, m):
    return ((n + m - 1) // m) * m


def _pick_batch_tile(B, max_tb=512):
    """Batch tile: small-batch latency path vs. 256-multiple throughput path."""
    B = max(int(B), 1)
    if B <= 128:
        # Latency path (control-loop inference): bf16 sublane tile is 16 rows.
        return _round_up(B, 16)
    # Throughput path: 256-multiples fill the 256-wide MXU (v6e/v7x); prefer
    # >= 2 grid steps so dimension_semantics=("parallel",) can use both v7x TCs.
    half = _round_up((B + 1) // 2, 256)
    return int(min(max_tb, half))


def actor_kernel(x_ref, w1_ref, b1_ref, w2_ref, b2_ref, w3_ref, b3_ref,
                 out_ref, *, max_action):
    # x arrives f32 and is cast to bf16 in-register (free VPU work) so the
    # wrapper never writes a padded/cast copy of x back to HBM.
    x = x_ref[...].astype(jnp.bfloat16)

    # layer_1 + ReLU  (K = state_dim, unpadded; output lanes padded to 512)
    h1 = jnp.dot(x, w1_ref[...], preferred_element_type=jnp.float32) + b1_ref[...]
    h1 = jnp.maximum(h1, 0.0).astype(jnp.bfloat16)

    # layer_2 + ReLU
    h2 = jnp.dot(h1, w2_ref[...], preferred_element_type=jnp.float32) + b2_ref[...]
    h2 = jnp.maximum(h2, 0.0).astype(jnp.bfloat16)

    # layer_3 + max_action * tanh (tanh on EUP, f32), stored bf16 lane-dense.
    h3 = jnp.dot(h2, w3_ref[...], preferred_element_type=jnp.float32) + b3_ref[...]
    out_ref[...] = (max_action * jnp.tanh(h3)).astype(out_ref.dtype)


def init_actor_params(key, state_dim, action_dim):
    """PyTorch nn.Linear-style init: U(-1/sqrt(fan_in), 1/sqrt(fan_in)).
    Weights stored as (in, out); biases as (1, out)."""
    dims = [(state_dim, 400), (400, 300), (300, action_dim)]
    params = {}
    for i, (fin, fout) in enumerate(dims, start=1):
        key, kw, kb = jax.random.split(key, 3)
        bound = 1.0 / jnp.sqrt(float(fin))
        params[f"w{i}"] = jax.random.uniform(kw, (fin, fout), jnp.float32, -bound, bound)
        params[f"b{i}"] = jax.random.uniform(kb, (1, fout), jnp.float32, -bound, bound)
    return params


def prepare_actor_params(params, state_dim, action_dim):
    """Zero-pad hidden/action dims to lane multiples and cast weights to bf16.
    Layer-1's K dim stays at state_dim (x is passed unpadded)."""
    h1, h2 = params["w1"].shape[1], params["w2"].shape[1]
    h1_pad = _round_up(h1, LANE)
    h2_pad = _round_up(h2, LANE)
    a_pad = _round_up(action_dim, LANE)

    def pad2(a, rows, cols):
        return jnp.zeros((rows, cols), a.dtype).at[:a.shape[0], :a.shape[1]].set(a)

    return {
        "w1": pad2(params["w1"], state_dim, h1_pad).astype(jnp.bfloat16),
        "b1": pad2(params["b1"], 1, h1_pad),                       # f32
        "w2": pad2(params["w2"], h1_pad, h2_pad).astype(jnp.bfloat16),
        "b2": pad2(params["b2"], 1, h2_pad),                       # f32
        "w3": pad2(params["w3"], h2_pad, a_pad).astype(jnp.bfloat16),
        "b3": pad2(params["b3"], 1, a_pad),                        # f32
    }


def actor_forward(x, packed, max_action, action_dim, *, max_tb=512):
    """x: (B, state_dim) f32.  packed: prepared params.  Returns (B, action_dim) f32."""
    B, state_dim = x.shape
    s_in, h1_pad = packed["w1"].shape
    assert s_in == state_dim, "packed params do not match state_dim"
    h2_pad = packed["w2"].shape[1]
    a_pad = packed["w3"].shape[1]

    tb = _pick_batch_tile(B, max_tb)
    b_pad = _round_up(max(B, 1), tb)
    # Only pad the batch axis, only when needed (state_dim stays unpadded).
    x_in = x if b_pad == B else jnp.pad(x, ((0, b_pad - B), (0, 0)))

    kernel = functools.partial(actor_kernel, max_action=float(max_action))
    const = lambda i: (0, 0)  # weights/biases: same block every step -> VMEM-resident

    out_pad = pl.pallas_call(
        kernel,
        out_shape=jax.ShapeDtypeStruct((b_pad, a_pad), jnp.bfloat16),
        grid_spec=pltpu.PrefetchScalarGridSpec(
            num_scalar_prefetch=0,
            grid=(b_pad // tb,),
            in_specs=[
                pl.BlockSpec((tb, state_dim), lambda i: (i, 0)),   # x tile walks batch
                pl.BlockSpec((state_dim, h1_pad), const),          # W1 resident
                pl.BlockSpec((1, h1_pad), const),                  # b1 resident
                pl.BlockSpec((h1_pad, h2_pad), const),             # W2 resident
                pl.BlockSpec((1, h2_pad), const),                  # b2 resident
                pl.BlockSpec((h2_pad, a_pad), const),              # W3 resident
                pl.BlockSpec((1, a_pad), const),                   # b3 resident
            ],
            out_specs=pl.BlockSpec((tb, a_pad), lambda i: (i, 0)),
        ),
        compiler_params=pltpu.CompilerParams(
            dimension_semantics=("parallel",),      # batch tiles shard over TCs (v7x)
            vmem_limit_bytes=32 * 1024 * 1024,      # headroom on v5e's 16 MiB default
        ),
    )(x_in, packed["w1"], packed["b1"], packed["w2"], packed["b2"],
      packed["w3"], packed["b3"])

    return out_pad[:B, :action_dim].astype(jnp.float32)


if __name__ == "__main__":
    state_dim = 16
    action_dim = 4
    max_action = 2.0
    batch = 2

    key = jax.random.PRNGKey(0)
    key, kx, kx2 = jax.random.split(key, 3)
    x = jax.random.normal(kx, (batch, state_dim), jnp.float32)
    params = init_actor_params(key, state_dim, action_dim)
    packed = prepare_actor_params(params, state_dim, action_dim)

    # Reference 1: same math with identical bf16 matmul operands (tight check).
    def ref_bf16(x, p):
        xb = x.astype(jnp.bfloat16)
        w1 = p["w1"].astype(jnp.bfloat16)
        w2 = p["w2"].astype(jnp.bfloat16)
        w3 = p["w3"].astype(jnp.bfloat16)
        h1 = jnp.maximum(jnp.dot(xb, w1, preferred_element_type=jnp.float32) + p["b1"], 0.0)
        h2 = jnp.maximum(jnp.dot(h1.astype(jnp.bfloat16), w2,
                                 preferred_element_type=jnp.float32) + p["b2"], 0.0)
        h3 = jnp.dot(h2.astype(jnp.bfloat16), w3,
                     preferred_element_type=jnp.float32) + p["b3"]
        return max_action * jnp.tanh(h3)

    # Reference 2: pure-f32 math (loose check; bf16 operands/output trade precision).
    def ref_f32(x, p):
        h1 = jnp.maximum(x @ p["w1"] + p["b1"], 0.0)
        h2 = jnp.maximum(h1 @ p["w2"] + p["b2"], 0.0)
        return max_action * jnp.tanh(h2 @ p["w3"] + p["b3"])

    # --- small-batch (latency) path: B=2 -> 16-row tile, 1 grid step ---
    out = actor_forward(x, packed, max_action, action_dim)
    out = jax.block_until_ready(out)
    assert out.shape == (batch, action_dim)
    assert jnp.all(jnp.abs(out) <= max_action + 1e-3)
    assert jnp.allclose(out, ref_bf16(x, params), atol=2e-2, rtol=2e-2)
    assert jnp.allclose(out, ref_f32(x, params), atol=6e-2, rtol=6e-2)

    # --- throughput path: B=600 -> 512-row tile, 2 parallel grid steps ---
    x_big = jax.random.normal(kx2, (600, state_dim), jnp.float32)
    out_big = jax.block_until_ready(actor_forward(x_big, packed, max_action, action_dim))
    assert out_big.shape == (600, action_dim)
    assert jnp.all(jnp.abs(out_big) <= max_action + 1e-3)
    assert jnp.allclose(out_big, ref_bf16(x_big, params), atol=2e-2, rtol=2e-2)
    assert jnp.allclose(out_big, ref_f32(x_big, params), atol=6e-2, rtol=6e-2)

    print("KERNEL_OK")
</pallas_src>

<mosaic_0001>
module attributes {stable_mosaic.version = 11 : i64} {
  func.func @actor_kernel(%arg0: i32, %arg1: memref<16x16xf32, #tpu.memory_space<vmem>>, %arg2: memref<16x512xbf16, #tpu.memory_space<vmem>>, %arg3: memref<1x512xf32, #tpu.memory_space<vmem>>, %arg4: memref<512x384xbf16, #tpu.memory_space<vmem>>, %arg5: memref<1x384xf32, #tpu.memory_space<vmem>>, %arg6: memref<384x128xbf16, #tpu.memory_space<vmem>>, %arg7: memref<1x128xf32, #tpu.memory_space<vmem>>, %arg8: memref<16x128xbf16, #tpu.memory_space<vmem>>) attributes {dimension_semantics = [#tpu.dimension_semantics<parallel>], iteration_bounds = array<i64: 1>, scalar_prefetch = 0 : i64, scratch_operands = 0 : i64, tpu.core_type = #tpu.core_type<tc>, window_params = [{transform_indices = @transform_0, window_bounds = array<i64: 16, 16>}, {pipeline_mode = #tpu.pipeline_mode<synchronous>, transform_indices = @transform_1, window_bounds = array<i64: 16, 512>}, {pipeline_mode = #tpu.pipeline_mode<synchronous>, transform_indices = @transform_2, window_bounds = array<i64: 1, 512>}, {pipeline_mode = #tpu.pipeline_mode<synchronous>, transform_indices = @transform_3, window_bounds = array<i64: 512, 384>}, {pipeline_mode = #tpu.pipeline_mode<synchronous>, transform_indices = @transform_4, window_bounds = array<i64: 1, 384>}, {pipeline_mode = #tpu.pipeline_mode<synchronous>, transform_indices = @transform_5, window_bounds = array<i64: 384, 128>}, {pipeline_mode = #tpu.pipeline_mode<synchronous>, transform_indices = @transform_6, window_bounds = array<i64: 1, 128>}, {transform_indices = @transform_7, window_bounds = array<i64: 16, 128>}]} {
    %c0 = arith.constant 0 : index
    %c0_0 = arith.constant 0 : index
    %0 = vector.load %arg1[%c0, %c0_0] : memref<16x16xf32, #tpu.memory_space<vmem>>, vector<16x16xf32>
    %1 = arith.truncf %0 : vector<16x16xf32> to vector<16x16xbf16>
    %c0_1 = arith.constant 0 : index
    %c0_2 = arith.constant 0 : index
    %2 = vector.load %arg2[%c0_1, %c0_2] : memref<16x512xbf16, #tpu.memory_space<vmem>>, vector<16x512xbf16>
    %cst = arith.constant dense<0.000000e+00> : vector<16x512xf32>
    %3 = tpu.matmul %1, %2, %cst {dimension_numbers = #tpu.dot_dimension_numbers<[1], [0], [0], [1], [0, 0, 1, 1], [], []>} : vector<16x16xbf16>, vector<16x512xbf16>, vector<16x512xf32> -> vector<16x512xf32>
    %c0_3 = arith.constant 0 : index
    %c0_4 = arith.constant 0 : index
    %4 = vector.load %arg3[%c0_3, %c0_4] : memref<1x512xf32, #tpu.memory_space<vmem>>, vector<1x512xf32>
    %5 = vector.broadcast %4 : vector<1x512xf32> to vector<16x512xf32>
    %6 = arith.addf %3, %5 : vector<16x512xf32>
    %cst_5 = arith.constant 0.000000e+00 : f32
    %7 = vector.broadcast %cst_5 : f32 to vector<16x512xf32>
    %8 = arith.maximumf %6, %7 : vector<16x512xf32>
    %9 = arith.truncf %8 : vector<16x512xf32> to vector<16x512xbf16>
    %c0_6 = arith.constant 0 : index
    %c0_7 = arith.constant 0 : index
    %10 = vector.load %arg4[%c0_6, %c0_7] : memref<512x384xbf16, #tpu.memory_space<vmem>>, vector<512x384xbf16>
    %cst_8 = arith.constant dense<0.000000e+00> : vector<16x384xf32>
    %11 = tpu.matmul %9, %10, %cst_8 {dimension_numbers = #tpu.dot_dimension_numbers<[1], [0], [0], [1], [0, 0, 1, 1], [], []>} : vector<16x512xbf16>, vector<512x384xbf16>, vector<16x384xf32> -> vector<16x384xf32>
    %c0_9 = arith.constant 0 : index
    %c0_10 = arith.constant 0 : index
    %12 = vector.load %arg5[%c0_9, %c0_10] : memref<1x384xf32, #tpu.memory_space<vmem>>, vector<1x384xf32>
    %13 = vector.broadcast %12 : vector<1x384xf32> to vector<16x384xf32>
    %14 = arith.addf %11, %13 : vector<16x384xf32>
    %cst_11 = arith.constant 0.000000e+00 : f32
    %15 = vector.broadcast %cst_11 : f32 to vector<16x384xf32>
    %16 = arith.maximumf %14, %15 : vector<16x384xf32>
    %17 = arith.truncf %16 : vector<16x384xf32> to vector<16x384xbf16>
    %c0_12 = arith.constant 0 : index
    %c0_13 = arith.constant 0 : index
    %18 = vector.load %arg6[%c0_12, %c0_13] : memref<384x128xbf16, #tpu.memory_space<vmem>>, vector<384x128xbf16>
    %cst_14 = arith.constant dense<0.000000e+00> : vector<16x128xf32>
    %19 = tpu.matmul %17, %18, %cst_14 {dimension_numbers = #tpu.dot_dimension_numbers<[1], [0], [0], [1], [0, 0, 1, 1], [], []>} : vector<16x384xbf16>, vector<384x128xbf16>, vector<16x128xf32> -> vector<16x128xf32>
    %c0_15 = arith.constant 0 : index
    %c0_16 = arith.constant 0 : index
    %20 = vector.load %arg7[%c0_15, %c0_16] : memref<1x128xf32, #tpu.memory_space<vmem>>, vector<1x128xf32>
    %21 = vector.broadcast %20 : vector<1x128xf32> to vector<16x128xf32>
    %22 = arith.addf %19, %21 : vector<16x128xf32>
    %23 = math.tanh %22 : vector<16x128xf32>
    %cst_17 = arith.constant 2.000000e+00 : f32
    %24 = vector.broadcast %cst_17 : f32 to vector<16x128xf32>
    %25 = arith.mulf %24, %23 : vector<16x128xf32>
    %26 = arith.truncf %25 : vector<16x128xf32> to vector<16x128xbf16>
    %c0_18 = arith.constant 0 : index
    %c0_19 = arith.constant 0 : index
    %27 = vector.load %arg8[%c0_18, %c0_19] : memref<16x128xbf16, #tpu.memory_space<vmem>>, vector<16x128xbf16>
    tpu.vector_store %arg8[%c0_18, %c0_19], %26 {strides = array<i32>} : memref<16x128xbf16, #tpu.memory_space<vmem>>, vector<16x128xbf16>,
    return
  }
  func.func @transform_0(%arg0: i32) -> (i32, i32) {
    %c0_i32 = arith.constant 0 : i32
    %c0_i32_0 = arith.constant 0 : i32
    return %arg0, %c0_i32 : i32, i32
  }
  func.func @transform_1(%arg0: i32) -> (i32, i32) {
    %c0_i32 = arith.constant 0 : i32
    %c0_i32_0 = arith.constant 0 : i32
    %c0_i32_1 = arith.constant 0 : i32
    return %c0_i32, %c0_i32_0 : i32, i32
  }
  func.func @transform_2(%arg0: i32) -> (i32, i32) {
    %c0_i32 = arith.constant 0 : i32
    %c0_i32_0 = arith.constant 0 : i32
    %c0_i32_1 = arith.constant 0 : i32
    return %c0_i32, %c0_i32_0 : i32, i32
  }
  func.func @transform_3(%arg0: i32) -> (i32, i32) {
    %c0_i32 = arith.constant 0 : i32
    %c0_i32_0 = arith.constant 0 : i32
    %c0_i32_1 = arith.constant 0 : i32
    return %c0_i32, %c0_i32_0 : i32, i32
  }
  func.func @transform_4(%arg0: i32) -> (i32, i32) {
    %c0_i32 = arith.constant 0 : i32
    %c0_i32_0 = arith.constant 0 : i32
    %c0_i32_1 = arith.constant 0 : i32
    return %c0_i32, %c0_i32_0 : i32, i32
  }
  func.func @transform_5(%arg0: i32) -> (i32, i32) {
    %c0_i32 = arith.constant 0 : i32
    %c0_i32_0 = arith.constant 0 : i32
    %c0_i32_1 = arith.constant 0 : i32
    return %c0_i32, %c0_i32_0 : i32, i32
  }
  func.func @transform_6(%arg0: i32) -> (i32, i32) {
    %c0_i32 = arith.constant 0 : i32
    %c0_i32_0 = arith.constant 0 : i32
    %c0_i32_1 = arith.constant 0 : i32
    return %c0_i32, %c0_i32_0 : i32, i32
  }
  func.func @transform_7(%arg0: i32) -> (i32, i32) {
    %c0_i32 = arith.constant 0 : i32
    %c0_i32_0 = arith.constant 0 : i32
    return %arg0, %c0_i32 : i32, i32
  }
}

</mosaic_0001>

<llo_original>
// kernel: tpu_custom_call.1
$region0: #{tpu_custom_call.1}
  #allocation0 [shape = 'u32[]', space=smem, size = 0x4, offset = 0x4, fixed_abs, tag = 'smem constant byte address 0x4 - core index']
  #allocation1 [shape = 'u32[72,128]{1,0:T(1,128)}', space=vmem, size = 0x9000, scoped, tag = 'internal scratch']
  %s0 = inlined_call_operand.hbm [shape: f32[16,16], index: 0, kind: input, shape index: {}]
  %s1 = inlined_call_operand.hbm [shape: bf16[16,512], index: 1, kind: input, shape index: {}]
  %s2 = inlined_call_operand.hbm [shape: f32[1,512], index: 2, kind: input, shape index: {}]
  %s3 = inlined_call_operand.hbm [shape: bf16[512,384], index: 3, kind: input, shape index: {}]
  %s4 = inlined_call_operand.vmem [shape: f32[1,384], index: 4, kind: input, shape index: {}]
  %s5 = inlined_call_operand.hbm [shape: bf16[384,128], index: 5, kind: input, shape index: {}]
  %s6 = inlined_call_operand.vmem [shape: f32[1,128], index: 6, kind: input, shape index: {}]
  %s7 = inlined_call_operand.hbm [shape: bf16[16,128], index: 7, kind: output, shape index: {}]
  %s8 = sld [smem:[#allocation0]]
  $region58: #{tpu_custom_call.1} parent=0
    _
  %s10 = ssub.s32 1, %s8
  %s11 = scalar_select 0, %s10, %s8
  $region1: #{tpu_custom_call.1} parent=0
    #allocation2 [shape = 'u8[8192]{0}', space=vmem, size = 0x2000, scoped, tag = 'input window, operand 0, single buffered']
    #allocation3 [shape = 's32[1]{0}', space=sflag, size = 0x4, scoped, tag = 'scoped memory for tpu_custom_call.1']
    #allocation4 [shape = 's32[1]{0}', space=sflag, size = 0x4, scoped, tag = 'scoped memory for tpu_custom_call.1']
    #allocation5 [shape = 'u8[16384]{0}', space=vmem, size = 0x4000, scoped, tag = 'input window, operand 1, single buffered']
    #allocation6 [shape = 's32[1]{0}', space=sflag, size = 0x4, scoped, tag = 'scoped memory for tpu_custom_call.1']
    #allocation7 [shape = 'u8[2048]{0}', space=vmem, size = 0x800, scoped, tag = 'input window, operand 2, single buffered']
    #allocation8 [shape = 'u8[393216]{0}', space=vmem, size = 0x60000, scoped, tag = 'input window, operand 3, single buffered']
    #allocation9 [shape = 's32[1]{0}', space=sflag, size = 0x4, scoped, tag = 'scoped memory for tpu_custom_call.1']
    #allocation10 [shape = 'u8[98304]{0}', space=vmem, size = 0x18000, scoped, tag = 'input window, operand 5, single buffered']
    #allocation11 [shape = 'u8[4096]{0}', space=vmem, size = 0x1000, scoped, tag = 'output window, operand 0, single buffered']
    %12 = vsyncpa [#allocation3], 0
    %13 = vsyncpa [#allocation6], 0
    %14 = vsyncpa [#allocation9], 0
    %15 = vsyncpa [#allocation4], 0
    // Predicated region
    $region2: #{tpu_custom_call.1} parent=1 // pred_check
      _
    $region3: #{tpu_custom_call.1} parent=1 // pred_check_branch
      %17 = sbr.rel (0) target = $region5
    $region4: #{tpu_custom_call.1} parent=1 // pred_region
      %19 = vsyncadd [#allocation3], 0
      %s20 = sshll.u32 %s0, 4
      %s21 = int_to_ptr.hbm [resolvable:$true] %s20
      %s22 = sshll.u32 [#allocation2], 4
      %s23 = int_to_ptr.vmem [resolvable:$true] %s22
      %28 = dma.hbm_to_vmem [thread:$0]  %s21, 256, %s23, [#allocation3], 128, 128, 8
    $region5: #{tpu_custom_call.1} parent=1 // pred_fallthru
      _
    // Predicated region
    $region6: #{tpu_custom_call.1} parent=1 // pred_check
      _
    $region7: #{tpu_custom_call.1} parent=1 // pred_check_branch
      %30 = sbr.rel (0) target = $region9
    $region8: #{tpu_custom_call.1} parent=1 // pred_region
      %32 = vsyncadd [#allocation6], 0
      %s33 = sshll.u32 %s1, 4
      %s34 = int_to_ptr.hbm [resolvable:$true] %s33
      %s35 = sshll.u32 [#allocation5], 4
      %s36 = int_to_ptr.vmem [resolvable:$true] %s35
      %41 = dma.hbm_to_vmem [thread:$0]  %s34, 512, %s36, [#allocation6], 256, 256, 16
    $region9: #{tpu_custom_call.1} parent=1 // pred_fallthru
      _
    // Predicated region
    $region10: #{tpu_custom_call.1} parent=1 // pred_check
      _
    $region11: #{tpu_custom_call.1} parent=1 // pred_check_branch
      %43 = sbr.rel (0) target = $region13
    $region12: #{tpu_custom_call.1} parent=1 // pred_region
      %45 = vsyncadd [#allocation6], 0
      %s47 = sshll.u32 %s2, 4
      %s48 = int_to_ptr.hbm [resolvable:$true] %s47
      %s49 = sshll.u32 [#allocation7], 4
      %s50 = int_to_ptr.vmem [resolvable:$true] %s49
      %52 = dma.hbm_to_vmem [thread:$0]  %s48, 64, %s50, [#allocation6]
    $region13: #{tpu_custom_call.1} parent=1 // pred_fallthru
      _
    // Predicated region
    $region14: #{tpu_custom_call.1} parent=1 // pred_check
      _
    $region15: #{tpu_custom_call.1} parent=1 // pred_check_branch
      %54 = sbr.rel (0) target = $region17
    $region16: #{tpu_custom_call.1} parent=1 // pred_region
      %56 = vsyncadd [#allocation9], 0
      %s57 = sshll.u32 %s3, 4
      %s58 = int_to_ptr.hbm [resolvable:$true] %s57
      %s59 = sshll.u32 [#allocation8], 4
      %s60 = int_to_ptr.vmem [resolvable:$true] %s59
      %65 = dma.hbm_to_vmem [thread:$0]  %s58, 12288, %s60, [#allocation9], 192, 192, 12
    $region17: #{tpu_custom_call.1} parent=1 // pred_fallthru
      _
    // Predicated region
    $region18: #{tpu_custom_call.1} parent=1 // pred_check
      _
    $region19: #{tpu_custom_call.1} parent=1 // pred_check_branch
      %67 = sbr.rel (0) target = $region21
    $region20: #{tpu_custom_call.1} parent=1 // pred_region
      _
    $region21: #{tpu_custom_call.1} parent=1 // pred_fallthru
      _
    // Predicated region
    $region22: #{tpu_custom_call.1} parent=1 // pred_check
      _
    $region23: #{tpu_custom_call.1} parent=1 // pred_check_branch
      %69 = sbr.rel (0) target = $region25
    $region24: #{tpu_custom_call.1} parent=1 // pred_region
      %71 = vsyncadd [#allocation9], 0
      %s72 = sshll.u32 %s5, 4
      %s73 = int_to_ptr.hbm [resolvable:$true] %s72
      %s74 = sshll.u32 [#allocation10], 4
      %s75 = int_to_ptr.vmem [resolvable:$true] %s74
      %80 = dma.hbm_to_vmem [thread:$0]  %s73, 3072, %s75, [#allocation9], 64, 64, 4
    $region25: #{tpu_custom_call.1} parent=1 // pred_fallthru
      _
    // Predicated region
    $region26: #{tpu_custom_call.1} parent=1 // pred_check
      _
    $region27: #{tpu_custom_call.1} parent=1 // pred_check_branch
      %82 = sbr.rel (0) target = $region29
    $region28: #{tpu_custom_call.1} parent=1 // pred_region
      _
    $region29: #{tpu_custom_call.1} parent=1 // pred_fallthru
      _
    // Predicated region
    $region30: #{tpu_custom_call.1} parent=1 // pred_check
      _
    $region31: #{tpu_custom_call.1} parent=1 // pred_check_branch
      %84 = sbr.rel (0) target = $region33
    $region32: #{tpu_custom_call.1} parent=1 // pred_region
      %86 = dma.done [#allocation3], 256
    $region33: #{tpu_custom_call.1} parent=1 // pred_fallthru
      _
    // Predicated region
    $region34: #{tpu_custom_call.1} parent=1 // pred_check
      _
    $region35: #{tpu_custom_call.1} parent=1 // pred_check_branch
      %88 = sbr.rel (0) target = $region37
    $region36: #{tpu_custom_call.1} parent=1 // pred_region
      %90 = dma.done [#allocation6], 512
    $region37: #{tpu_custom_call.1} parent=1 // pred_fallthru
      _
    // Predicated region
    $region38: #{tpu_custom_call.1} parent=1 // pred_check
      _
    $region39: #{tpu_custom_call.1} parent=1 // pred_check_branch
      %92 = sbr.rel (0) target = $region41
    $region40: #{tpu_custom_call.1} parent=1 // pred_region
      %94 = dma.done [#allocation6], 64
    $region41: #{tpu_custom_call.1} parent=1 // pred_fallthru
      _
    // Predicated region
    $region42: #{tpu_custom_call.1} parent=1 // pred_check
      _
    $region43: #{tpu_custom_call.1} parent=1 // pred_check_branch
      %96 = sbr.rel (0) target = $region45
    $region44: #{tpu_custom_call.1} parent=1 // pred_region
      %98 = dma.done [#allocation9], 12288
    $region45: #{tpu_custom_call.1} parent=1 // pred_fallthru
      _
    // Predicated region
    $region46: #{tpu_custom_call.1} parent=1 // pred_check
      _
    $region47: #{tpu_custom_call.1} parent=1 // pred_check_branch
      %100 = sbr.rel (0) target = $region49
    $region48: #{tpu_custom_call.1} parent=1 // pred_region
      %102 = dma.done [#allocation9], 3072
    $region49: #{tpu_custom_call.1} parent=1 // pred_fallthru
      _
    %v104 = vld [vmem:[#allocation2] sm:$0xff]
    %v105 = vld [vmem:[#allocation2 + $0x8] sm:$0xff]
    %v106 = vpack.c.bf16 %v105, %v104
    %v107 = vld [vmem:[#allocation5] sm:$0xff]
    %v108 = vld [vmem:[#allocation5 + $0x8] sm:$0xff]
    %v109 = vld [vmem:[#allocation5 + $0x10] sm:$0xff]
    %v110 = vld [vmem:[#allocation5 + $0x18] sm:$0xff]
    %v111 = vld [vmem:[#allocation7] sm:$0xf]
    %v113 = vperm.slane %v111, 0
    %v114 = vperm.slane %v111, 1
    %v115 = vperm.slane %v111, 2
    %v116 = vperm.slane %v111, 3
    %v125 = vunpack.c.l.b16 %v107
    %v126 = vunpack.c.h.b16 %v107
    %v127 = vunpack.c.l.b16 %v108
    %v128 = vunpack.c.h.b16 %v108
    %v129 = vunpack.c.l.b16 %v109
    %v130 = vunpack.c.h.b16 %v109
    %v131 = vunpack.c.l.b16 %v110
    %v132 = vunpack.c.h.b16 %v110
    %v133 = vpack.c.b16 %v129, %v125
    %v134 = vpack.c.b16 %v130, %v126
    %v135 = vpack.c.b16 %v131, %v127
    %v136 = vpack.c.b16 %v132, %v128
    %vm141 = vcmask 130048
    %v143 = vsel %vm141, %v106, 0
    %145 = vmatpush.bf16.msra.mxu0 0
    %146 = vmatpush.bf16.msra.mxu0 0
    %147 = vmatpush.bf16.msra.mxu0 0
    %148 = vmatpush.bf16.msra.mxu0 0
    %149 = vmatpush.bf16.msra.mxu0 0
    %150 = vmatpush.bf16.msra.mxu0 0
    %151 = vmatpush.bf16.msra.mxu0 0
    %152 = vmatpush.bf16.msra.mxu0 %v133
    %153 = vmatmul.bf16.gmra.mxu0 %v143
    %v154 = vpop.f32.mrf.mxu0
    %v155 = vadd.f32 %v113, %v154
    %v156 = vpop.f32.mrf.mxu0
    %v157 = vadd.f32 %v113, %v156
    %158 = vdwg.mxu0
    %159 = vmatpush.bf16.msra.mxu0 0
    %160 = vmatpush.bf16.msra.mxu0 0
    %161 = vmatpush.bf16.msra.mxu0 0
    %162 = vmatpush.bf16.msra.mxu0 0
    %163 = vmatpush.bf16.msra.mxu0 0
    %164 = vmatpush.bf16.msra.mxu0 0
    %165 = vmatpush.bf16.msra.mxu0 0
    %166 = vmatpush.bf16.msra.mxu0 %v134
    %167 = vmatmul.bf16.gmra.mxu0 %v143
    %v168 = vpop.f32.mrf.mxu0
    %v169 = vadd.f32 %v114, %v168
    %v170 = vpop.f32.mrf.mxu0
    %v171 = vadd.f32 %v114, %v170
    %172 = vdwg.mxu0
    %173 = vmatpush.bf16.msra.mxu0 0
    %174 = vmatpush.bf16.msra.mxu0 0
    %175 = vmatpush.bf16.msra.mxu0 0
    %176 = vmatpush.bf16.msra.mxu0 0
    %177 = vmatpush.bf16.msra.mxu0 0
    %178 = vmatpush.bf16.msra.mxu0 0
    %179 = vmatpush.bf16.msra.mxu0 0
    %180 = vmatpush.bf16.msra.mxu0 %v135
    %181 = vmatmul.bf16.gmra.mxu0 %v143
    %v182 = vpop.f32.mrf.mxu0
    %v183 = vadd.f32 %v115, %v182
    %v184 = vpop.f32.mrf.mxu0
    %v185 = vadd.f32 %v115, %v184
    %186 = vdwg.mxu0
    %187 = vmatpush.bf16.msra.mxu0 0
    %188 = vmatpush.bf16.msra.mxu0 0
    %189 = vmatpush.bf16.msra.mxu0 0
    %190 = vmatpush.bf16.msra.mxu0 0
    %191 = vmatpush.bf16.msra.mxu0 0
    %192 = vmatpush.bf16.msra.mxu0 0
    %193 = vmatpush.bf16.msra.mxu0 0
    %194 = vmatpush.bf16.msra.mxu0 %v136
    %195 = vmatmul.bf16.gmra.mxu0 %v143
    %v196 = vpop.f32.mrf.mxu0
    %v197 = vadd.f32 %v116, %v196
    %v198 = vpop.f32.mrf.mxu0
    %v199 = vadd.f32 %v116, %v198
    %200 = vdwg.mxu0
    %v201 = vmax.f32 %v155, 0.0
    %v202 = vmax.f32 %v169, 0.0
    %v203 = vmax.f32 %v183, 0.0
    %v204 = vmax.f32 %v197, 0.0
    %v205 = vmax.f32 %v157, 0.0
    %v206 = vmax.f32 %v171, 0.0
    %v207 = vmax.f32 %v185, 0.0
    %v208 = vmax.f32 %v199, 0.0
    %v209 = vpack.c.bf16 %v205, %v201
    %v210 = vpack.c.bf16 %v206, %v202
    %v211 = vpack.c.bf16 %v207, %v203
    %v212 = vpack.c.bf16 %v208, %v204
    %v213 = vld [vmem:[#allocation8] sm:$0xff]
    %v214 = vld [vmem:[#allocation8 + $0x8] sm:$0xf]
    %v215 = vld [vmem:[#allocation8 + $0xc] sm:$0xff]
    %v216 = vld [vmem:[#allocation8 + $0x14] sm:$0xf]
    %v217 = vld [vmem:[#allocation8 + $0x18] sm:$0xff]
    %v218 = vld [vmem:[#allocation8 + $0x20] sm:$0xf]
    %v219 = vld [vmem:[#allocation8 + $0x24] sm:$0xff]
    %v220 = vld [vmem:[#allocation8 + $0x2c] sm:$0xf]
    %v221 = vld [vmem:[#allocation8 + $0x30] sm:$0xff]
    %v222 = vld [vmem:[#allocation8 + $0x38] sm:$0xf]
    %v223 = vld [vmem:[#allocation8 + $0x3c] sm:$0xff]
    %v224 = vld [vmem:[#allocation8 + $0x44] sm:$0xf]
    %v225 = vld [vmem:[#allocation8 + $0x48] sm:$0xff]
    %v226 = vld [vmem:[#allocation8 + $0x50] sm:$0xf]
    %v227 = vld [vmem:[#allocation8 + $0x54] sm:$0xff]
    %v228 = vld [vmem:[#allocation8 + $0x5c] sm:$0xf]
    %v229 = vld [vmem:[#allocation8 + $0x60] sm:$0xff]
    %v230 = vld [vmem:[#allocation8 + $0x68] sm:$0xf]
    %v231 = vld [vmem:[#allocation8 + $0x6c] sm:$0xff]
    %v232 = vld [vmem:[#allocation8 + $0x74] sm:$0xf]
    %v233 = vld [vmem:[#allocation8 + $0x78] sm:$0xff]
    %v234 = vld [vmem:[#allocation8 + $0x80] sm:$0xf]
    %v235 = vld [vmem:[#allocation8 + $0x84] sm:$0xff]
    %v236 = vld [vmem:[#allocation8 + $0x8c] sm:$0xf]
    %v237 = vld [vmem:[#allocation8 + $0x90] sm:$0xff]
    %v238 = vld [vmem:[#allocation8 + $0x98] sm:$0xf]
    %v239 = vld [vmem:[#allocation8 + $0x9c] sm:$0xff]
    %v240 = vld [vmem:[#allocation8 + $0xa4] sm:$0xf]
    %v241 = vld [vmem:[#allocation8 + $0xa8] sm:$0xff]
    %v242 = vld [vmem:[#allocation8 + $0xb0] sm:$0xf]
    %v243 = vld [vmem:[#allocation8 + $0xb4] sm:$0xff]
    %v244 = vld [vmem:[#allocation8 + $0xbc] sm:$0xf]
    %v245 = vld [vmem:[#allocation8 + $0xc0] sm:$0xff]
    %v246 = vld [vmem:[#allocation8 + $0xc8] sm:$0xf]
    %v247 = vld [vmem:[#allocation8 + $0xcc] sm:$0xff]
    %v248 = vld [vmem:[#allocation8 + $0xd4] sm:$0xf]
    %v249 = vld [vmem:[#allocation8 + $0xd8] sm:$0xff]
    %v250 = vld [vmem:[#allocation8 + $0xe0] sm:$0xf]
    %v251 = vld [vmem:[#allocation8 + $0xe4] sm:$0xff]
    %v252 = vld [vmem:[#allocation8 + $0xec] sm:$0xf]
    %v253 = vld [vmem:[#allocation8 + $0xf0] sm:$0xff]
    %v254 = vld [vmem:[#allocation8 + $0xf8] sm:$0xf]
    %v255 = vld [vmem:[#allocation8 + $0xfc] sm:$0xff]
    %v256 = vld [vmem:[#allocation8 + $0x104] sm:$0xf]
    %v257 = vld [vmem:[#allocation8 + $0x108] sm:$0xff]
    %v258 = vld [vmem:[#allocation8 + $0x110] sm:$0xf]
    %v259 = vld [vmem:[#allocation8 + $0x114] sm:$0xff]
    %v260 = vld [vmem:[#allocation8 + $0x11c] sm:$0xf]
    %v261 = vld [vmem:[#allocation8 + $0x120] sm:$0xff]
    %v262 = vld [vmem:[#allocation8 + $0x128] sm:$0xf]
    %v263 = vld [vmem:[#allocation8 + $0x12c] sm:$0xff]
    %v264 = vld [vmem:[#allocation8 + $0x134] sm:$0xf]
    %v265 = vld [vmem:[#allocation8 + $0x138] sm:$0xff]
    %v266 = vld [vmem:[#allocation8 + $0x140] sm:$0xf]
    %v267 = vld [vmem:[#allocation8 + $0x144] sm:$0xff]
    %v268 = vld [vmem:[#allocation8 + $0x14c] sm:$0xf]
    %v269 = vld [vmem:[#allocation8 + $0x150] sm:$0xff]
    %v270 = vld [vmem:[#allocation8 + $0x158] sm:$0xf]
    %v271 = vld [vmem:[#allocation8 + $0x15c] sm:$0xff]
    %v272 = vld [vmem:[#allocation8 + $0x164] sm:$0xf]
    %v273 = vld [vmem:[#allocation8 + $0x168] sm:$0xff]
    %v274 = vld [vmem:[#allocation8 + $0x170] sm:$0xf]
    %v275 = vld [vmem:[#allocation8 + $0x174] sm:$0xff]
    %v276 = vld [vmem:[#allocation8 + $0x17c] sm:$0xf]
    %v277 = vld [vmem:[#allocation8 + $0x180] sm:$0xff]
    %v278 = vld [vmem:[#allocation8 + $0x188] sm:$0xf]
    %v279 = vld [vmem:[#allocation8 + $0x18c] sm:$0xff]
    %v280 = vld [vmem:[#allocation8 + $0x194] sm:$0xf]
    %v281 = vld [vmem:[#allocation8 + $0x198] sm:$0xff]
    %v282 = vld [vmem:[#allocation8 + $0x1a0] sm:$0xf]
    %v283 = vld [vmem:[#allocation8 + $0x1a4] sm:$0xff]
    %v284 = vld [vmem:[#allocation8 + $0x1ac] sm:$0xf]
    %v285 = vld [vmem:[#allocation8 + $0x1b0] sm:$0xff]
    %v286 = vld [vmem:[#allocation8 + $0x1b8] sm:$0xf]
    %v287 = vld [vmem:[#allocation8 + $0x1bc] sm:$0xff]
    %v288 = vld [vmem:[#allocation8 + $0x1c4] sm:$0xf]
    %v289 = vld [vmem:[#allocation8 + $0x1c8] sm:$0xff]
    %v290 = vld [vmem:[#allocation8 + $0x1d0] sm:$0xf]
    %v291 = vld [vmem:[#allocation8 + $0x1d4] sm:$0xff]
    %v292 = vld [vmem:[#allocation8 + $0x1dc] sm:$0xf]
    %v293 = vld [vmem:[#allocation8 + $0x1e0] sm:$0xff]
    %v294 = vld [vmem:[#allocation8 + $0x1e8] sm:$0xf]
    %v295 = vld [vmem:[#allocation8 + $0x1ec] sm:$0xff]
    %v296 = vld [vmem:[#allocation8 + $0x1f4] sm:$0xf]
    %v297 = vld [vmem:[#allocation8 + $0x1f8] sm:$0xff]
    %v298 = vld [vmem:[#allocation8 + $0x200] sm:$0xf]
    %v299 = vld [vmem:[#allocation8 + $0x204] sm:$0xff]
    %v300 = vld [vmem:[#allocation8 + $0x20c] sm:$0xf]
    %v301 = vld [vmem:[#allocation8 + $0x210] sm:$0xff]
    %v302 = vld [vmem:[#allocation8 + $0x218] sm:$0xf]
    %v303 = vld [vmem:[#allocation8 + $0x21c] sm:$0xff]
    %v304 = vld [vmem:[#allocation8 + $0x224] sm:$0xf]
    %v305 = vld [vmem:[#allocation8 + $0x228] sm:$0xff]
    %v306 = vld [vmem:[#allocation8 + $0x230] sm:$0xf]
    %v307 = vld [vmem:[#allocation8 + $0x234] sm:$0xff]
    %v308 = vld [vmem:[#allocation8 + $0x23c] sm:$0xf]
    %v309 = vld [vmem:[#allocation8 + $0x240] sm:$0xff]
    %v310 = vld [vmem:[#allocation8 + $0x248] sm:$0xf]
    %v311 = vld [vmem:[#allocation8 + $0x24c] sm:$0xff]
    %v312 = vld [vmem:[#allocation8 + $0x254] sm:$0xf]
    %v313 = vld [vmem:[#allocation8 + $0x258] sm:$0xff]
    %v314 = vld [vmem:[#allocation8 + $0x260] sm:$0xf]
    %v315 = vld [vmem:[#allocation8 + $0x264] sm:$0xff]
    %v316 = vld [vmem:[#allocation8 + $0x26c] sm:$0xf]
    %v317 = vld [vmem:[#allocation8 + $0x270] sm:$0xff]
    %v318 = vld [vmem:[#allocation8 + $0x278] sm:$0xf]
    %v319 = vld [vmem:[#allocation8 + $0x27c] sm:$0xff]
    %v320 = vld [vmem:[#allocation8 + $0x284] sm:$0xf]
    %v321 = vld [vmem:[#allocation8 + $0x288] sm:$0xff]
    %v322 = vld [vmem:[#allocation8 + $0x290] sm:$0xf]
    %v323 = vld [vmem:[#allocation8 + $0x294] sm:$0xff]
    %v324 = vld [vmem:[#allocation8 + $0x29c] sm:$0xf]
    %v325 = vld [vmem:[#allocation8 + $0x2a0] sm:$0xff]
    %v326 = vld [vmem:[#allocation8 + $0x2a8] sm:$0xf]
    %v327 = vld [vmem:[#allocation8 + $0x2ac] sm:$0xff]
    %v328 = vld [vmem:[#allocation8 + $0x2b4] sm:$0xf]
    %v329 = vld [vmem:[#allocation8 + $0x2b8] sm:$0xff]
    %v330 = vld [vmem:[#allocation8 + $0x2c0] sm:$0xf]
    %v331 = vld [vmem:[#allocation8 + $0x2c4] sm:$0xff]
    %v332 = vld [vmem:[#allocation8 + $0x2cc] sm:$0xf]
    %v333 = vld [vmem:[#allocation8 + $0x2d0] sm:$0xff]
    %v334 = vld [vmem:[#allocation8 + $0x2d8] sm:$0xf]
    %v335 = vld [vmem:[#allocation8 + $0x2dc] sm:$0xff]
    %v336 = vld [vmem:[#allocation8 + $0x2e4] sm:$0xf]
    %v337 = vld [vmem:[#allocation8 + $0x2e8] sm:$0xff]
    %v338 = vld [vmem:[#allocation8 + $0x2f0] sm:$0xf]
    %v339 = vld [vmem:[#allocation8 + $0x2f4] sm:$0xff]
    %v340 = vld [vmem:[#allocation8 + $0x2fc] sm:$0xf]
    %v341 = vld [vmem:[%s4] sm:$0x7]
    %v343 = vperm.slane %v341, 0
    %v344 = vperm.slane %v341, 1
    %v345 = vperm.slane %v341, 2
    %v477 = vunpack.c.l.b16 %v213
    %v478 = vunpack.c.h.b16 %v213
    %v479 = vunpack.c.l.b16 %v214
    %v480 = vunpack.c.l.b16 %v215
    %v481 = vunpack.c.h.b16 %v215
    %v482 = vunpack.c.l.b16 %v216
    %v483 = vunpack.c.l.b16 %v217
    %v484 = vunpack.c.h.b16 %v217
    %v485 = vunpack.c.l.b16 %v218
    %v486 = vunpack.c.l.b16 %v219
    %v487 = vunpack.c.h.b16 %v219
    %v488 = vunpack.c.l.b16 %v220
    %v489 = vunpack.c.l.b16 %v221
    %v490 = vunpack.c.h.b16 %v221
    %v491 = vunpack.c.l.b16 %v222
    %v492 = vunpack.c.l.b16 %v223
    %v493 = vunpack.c.h.b16 %v223
    %v494 = vunpack.c.l.b16 %v224
    %v495 = vunpack.c.l.b16 %v225
    %v496 = vunpack.c.h.b16 %v225
    %v497 = vunpack.c.l.b16 %v226
    %v498 = vunpack.c.l.b16 %v227
    %v499 = vunpack.c.h.b16 %v227
    %v500 = vunpack.c.l.b16 %v228
    %v501 = vunpack.c.l.b16 %v229
    %v502 = vunpack.c.h.b16 %v229
    %v503 = vunpack.c.l.b16 %v230
    %v504 = vunpack.c.l.b16 %v231
    %v505 = vunpack.c.h.b16 %v231
    %v506 = vunpack.c.l.b16 %v232
    %v507 = vunpack.c.l.b16 %v233
    %v508 = vunpack.c.h.b16 %v233
    %v509 = vunpack.c.l.b16 %v234
    %v510 = vunpack.c.l.b16 %v235
    %v511 = vunpack.c.h.b16 %v235
    %v512 = vunpack.c.l.b16 %v236
    %v513 = vunpack.c.l.b16 %v237
    %v514 = vunpack.c.h.b16 %v237
    %v515 = vunpack.c.l.b16 %v238
    %v516 = vunpack.c.l.b16 %v239
    %v517 = vunpack.c.h.b16 %v239
    %v518 = vunpack.c.l.b16 %v240
    %v519 = vunpack.c.l.b16 %v241
    %v520 = vunpack.c.h.b16 %v241
    %v521 = vunpack.c.l.b16 %v242
    %v522 = vunpack.c.l.b16 %v243
    %v523 = vunpack.c.h.b16 %v243
    %v524 = vunpack.c.l.b16 %v244
    %v525 = vunpack.c.l.b16 %v245
    %v526 = vunpack.c.h.b16 %v245
    %v527 = vunpack.c.l.b16 %v246
    %v528 = vunpack.c.l.b16 %v247
    %v529 = vunpack.c.h.b16 %v247
    %v530 = vunpack.c.l.b16 %v248
    %v531 = vunpack.c.l.b16 %v249
    %v532 = vunpack.c.h.b16 %v249
    %v533 = vunpack.c.l.b16 %v250
    %v534 = vunpack.c.l.b16 %v251
    %v535 = vunpack.c.h.b16 %v251
    %v536 = vunpack.c.l.b16 %v252
    %v537 = vunpack.c.l.b16 %v253
    %v538 = vunpack.c.h.b16 %v253
    %v539 = vunpack.c.l.b16 %v254
    %v540 = vunpack.c.l.b16 %v255
    %v541 = vunpack.c.h.b16 %v255
    %v542 = vunpack.c.l.b16 %v256
    %v543 = vunpack.c.l.b16 %v257
    %v544 = vunpack.c.h.b16 %v257
    %v545 = vunpack.c.l.b16 %v258
    %v546 = vunpack.c.l.b16 %v259
    %v547 = vunpack.c.h.b16 %v259
    %v548 = vunpack.c.l.b16 %v260
    %v549 = vunpack.c.l.b16 %v261
    %v550 = vunpack.c.h.b16 %v261
    %v551 = vunpack.c.l.b16 %v262
    %v552 = vunpack.c.l.b16 %v263
    %v553 = vunpack.c.h.b16 %v263
    %v554 = vunpack.c.l.b16 %v264
    %v555 = vunpack.c.l.b16 %v265
    %v556 = vunpack.c.h.b16 %v265
    %v557 = vunpack.c.l.b16 %v266
    %v558 = vunpack.c.l.b16 %v267
    %v559 = vunpack.c.h.b16 %v267
    %v560 = vunpack.c.l.b16 %v268
    %v561 = vunpack.c.l.b16 %v269
    %v562 = vunpack.c.h.b16 %v269
    %v563 = vunpack.c.l.b16 %v270
    %v564 = vunpack.c.l.b16 %v271
    %v565 = vunpack.c.h.b16 %v271
    %v566 = vunpack.c.l.b16 %v272
    %v567 = vunpack.c.l.b16 %v273
    %v568 = vunpack.c.h.b16 %v273
    %v569 = vunpack.c.l.b16 %v274
    %v570 = vunpack.c.l.b16 %v275
    %v571 = vunpack.c.h.b16 %v275
    %v572 = vunpack.c.l.b16 %v276
    %v573 = vunpack.c.l.b16 %v277
    %v574 = vunpack.c.h.b16 %v277
    %v575 = vunpack.c.l.b16 %v278
    %v576 = vunpack.c.l.b16 %v279
    %v577 = vunpack.c.h.b16 %v279
    %v578 = vunpack.c.l.b16 %v280
    %v579 = vunpack.c.l.b16 %v281
    %v580 = vunpack.c.h.b16 %v281
    %v581 = vunpack.c.l.b16 %v282
    %v582 = vunpack.c.l.b16 %v283
    %v583 = vunpack.c.h.b16 %v283
    %v584 = vunpack.c.l.b16 %v284
    %v585 = vunpack.c.l.b16 %v285
    %v586 = vunpack.c.h.b16 %v285
    %v587 = vunpack.c.l.b16 %v286
    %v588 = vunpack.c.l.b16 %v287
    %v589 = vunpack.c.h.b16 %v287
    %v590 = vunpack.c.l.b16 %v288
    %v591 = vunpack.c.l.b16 %v289
    %v592 = vunpack.c.h.b16 %v289
    %v593 = vunpack.c.l.b16 %v290
    %v594 = vunpack.c.l.b16 %v291
    %v595 = vunpack.c.h.b16 %v291
    %v596 = vunpack.c.l.b16 %v292
    %v597 = vunpack.c.l.b16 %v293
    %v598 = vunpack.c.h.b16 %v293
    %v599 = vunpack.c.l.b16 %v294
    %v600 = vunpack.c.l.b16 %v295
    %v601 = vunpack.c.h.b16 %v295
    %v602 = vunpack.c.l.b16 %v296
    %v603 = vunpack.c.l.b16 %v297
    %v604 = vunpack.c.h.b16 %v297
    %v605 = vunpack.c.l.b16 %v298
    %v606 = vunpack.c.l.b16 %v299
    %v607 = vunpack.c.h.b16 %v299
    %v608 = vunpack.c.l.b16 %v300
    %v609 = vunpack.c.l.b16 %v301
    %v610 = vunpack.c.h.b16 %v301
    %v611 = vunpack.c.l.b16 %v302
    %v612 = vunpack.c.l.b16 %v303
    %v613 = vunpack.c.h.b16 %v303
    %v614 = vunpack.c.l.b16 %v304
    %v615 = vunpack.c.l.b16 %v305
    %v616 = vunpack.c.h.b16 %v305
    %v617 = vunpack.c.l.b16 %v306
    %v618 = vunpack.c.l.b16 %v307
    %v619 = vunpack.c.h.b16 %v307
    %v620 = vunpack.c.l.b16 %v308
    %v621 = vunpack.c.l.b16 %v309
    %v622 = vunpack.c.h.b16 %v309
    %v623 = vunpack.c.l.b16 %v310
    %v624 = vunpack.c.l.b16 %v311
    %v625 = vunpack.c.h.b16 %v311
    %v626 = vunpack.c.l.b16 %v312
    %v627 = vunpack.c.l.b16 %v313
    %v628 = vunpack.c.h.b16 %v313
    %v629 = vunpack.c.l.b16 %v314
    %v630 = vunpack.c.l.b16 %v315
    %v631 = vunpack.c.h.b16 %v315
    %v632 = vunpack.c.l.b16 %v316
    %v633 = vunpack.c.l.b16 %v317
    %v634 = vunpack.c.h.b16 %v317
    %v635 = vunpack.c.l.b16 %v318
    %v636 = vunpack.c.l.b16 %v319
    %v637 = vunpack.c.h.b16 %v319
    %v638 = vunpack.c.l.b16 %v320
    %v639 = vunpack.c.l.b16 %v321
    %v640 = vunpack.c.h.b16 %v321
    %v641 = vunpack.c.l.b16 %v322
    %v642 = vunpack.c.l.b16 %v323
    %v643 = vunpack.c.h.b16 %v323
    %v644 = vunpack.c.l.b16 %v324
    %v645 = vunpack.c.l.b16 %v325
    %v646 = vunpack.c.h.b16 %v325
    %v647 = vunpack.c.l.b16 %v326
    %v648 = vunpack.c.l.b16 %v327
    %v649 = vunpack.c.h.b16 %v327
    %v650 = vunpack.c.l.b16 %v328
    %v651 = vunpack.c.l.b16 %v329
    %v652 = vunpack.c.h.b16 %v329
    %v653 = vunpack.c.l.b16 %v330
    %v654 = vunpack.c.l.b16 %v331
    %v655 = vunpack.c.h.b16 %v331
    %v656 = vunpack.c.l.b16 %v332
    %v657 = vunpack.c.l.b16 %v333
    %v658 = vunpack.c.h.b16 %v333
    %v659 = vunpack.c.l.b16 %v334
    %v660 = vunpack.c.l.b16 %v335
    %v661 = vunpack.c.h.b16 %v335
    %v662 = vunpack.c.l.b16 %v336
    %v663 = vunpack.c.l.b16 %v337
    %v664 = vunpack.c.h.b16 %v337
    %v665 = vunpack.c.l.b16 %v338
    %v666 = vunpack.c.l.b16 %v339
    %v667 = vunpack.c.h.b16 %v339
    %v668 = vunpack.c.l.b16 %v340
    %v669 = vpack.c.b16 %v480, %v477
    %v670 = vpack.c.b16 %v481, %v478
    %v671 = vpack.c.b16 %v482, %v479
    %v672 = vpack.c.b16 %v486, %v483
    %v673 = vpack.c.b16 %v487, %v484
    %v674 = vpack.c.b16 %v488, %v485
    %v675 = vpack.c.b16 %v492, %v489
    %v676 = vpack.c.b16 %v493, %v490
    %v677 = vpack.c.b16 %v494, %v491
    %v678 = vpack.c.b16 %v498, %v495
    %v679 = vpack.c.b16 %v499, %v496
    %v680 = vpack.c.b16 %v500, %v497
    %v681 = vpack.c.b16 %v504, %v501
    %v682 = vpack.c.b16 %v505, %v502
    %v683 = vpack.c.b16 %v506, %v503
    %v684 = vpack.c.b16 %v510, %v507
    %v685 = vpack.c.b16 %v511, %v508
    %v686 = vpack.c.b16 %v512, %v509
    %v687 = vpack.c.b16 %v516, %v513
    %v688 = vpack.c.b16 %v517, %v514
    %v689 = vpack.c.b16 %v518, %v515
    %v690 = vpack.c.b16 %v522, %v519
    %v691 = vpack.c.b16 %v523, %v520
    %v692 = vpack.c.b16 %v524, %v521
    %v693 = vpack.c.b16 %v528, %v525
    %v694 = vpack.c.b16 %v529, %v526
    %v695 = vpack.c.b16 %v530, %v527
    %v696 = vpack.c.b16 %v534, %v531
    %v697 = vpack.c.b16 %v535, %v532
    %v698 = vpack.c.b16 %v536, %v533
    %v699 = vpack.c.b16 %v540, %v537
    %v700 = vpack.c.b16 %v541, %v538
    %v701 = vpack.c.b16 %v542, %v539
    %v702 = vpack.c.b16 %v546, %v543
    %v703 = vpack.c.b16 %v547, %v544
    %v704 = vpack.c.b16 %v548, %v545
    %v705 = vpack.c.b16 %v552, %v549
    %v706 = vpack.c.b16 %v553, %v550
    %v707 = vpack.c.b16 %v554, %v551
    %v708 = vpack.c.b16 %v558, %v555
    %v709 = vpack.c.b16 %v559, %v556
    %v710 = vpack.c.b16 %v560, %v557
    %v711 = vpack.c.b16 %v564, %v561
    %v712 = vpack.c.b16 %v565, %v562
    %v713 = vpack.c.b16 %v566, %v563
    %v714 = vpack.c.b16 %v570, %v567
    %v715 = vpack.c.b16 %v571, %v568
    %v716 = vpack.c.b16 %v572, %v569
    %v717 = vpack.c.b16 %v576, %v573
    %v718 = vpack.c.b16 %v577, %v574
    %v719 = vpack.c.b16 %v578, %v575
    %v720 = vpack.c.b16 %v582, %v579
    %v721 = vpack.c.b16 %v583, %v580
    %v722 = vpack.c.b16 %v584, %v581
    %v723 = vpack.c.b16 %v588, %v585
    %v724 = vpack.c.b16 %v589, %v586
    %v725 = vpack.c.b16 %v590, %v587
    %v726 = vpack.c.b16 %v594, %v591
    %v727 = vpack.c.b16 %v595, %v592
    %v728 = vpack.c.b16 %v596, %v593
    %v729 = vpack.c.b16 %v600, %v597
    %v730 = vpack.c.b16 %v601, %v598
    %v731 = vpack.c.b16 %v602, %v599
    %v732 = vpack.c.b16 %v606, %v603
    %v733 = vpack.c.b16 %v607, %v604
    %v734 = vpack.c.b16 %v608, %v605
    %v735 = vpack.c.b16 %v612, %v609
    %v736 = vpack.c.b16 %v613, %v610
    %v737 = vpack.c.b16 %v614, %v611
    %v738 = vpack.c.b16 %v618, %v615
    %v739 = vpack.c.b16 %v619, %v616
    %v740 = vpack.c.b16 %v620, %v617
    %v741 = vpack.c.b16 %v624, %v621
    %v742 = vpack.c.b16 %v625, %v622
    %v743 = vpack.c.b16 %v626, %v623
    %v744 = vpack.c.b16 %v630, %v627
    %v745 = vpack.c.b16 %v631, %v628
    %v746 = vpack.c.b16 %v632, %v629
    %v747 = vpack.c.b16 %v636, %v633
    %v748 = vpack.c.b16 %v637, %v634
    %v749 = vpack.c.b16 %v638, %v635
    %v750 = vpack.c.b16 %v642, %v639
    %v751 = vpack.c.b16 %v643, %v640
    %v752 = vpack.c.b16 %v644, %v641
    %v753 = vpack.c.b16 %v648, %v645
    %v754 = vpack.c.b16 %v649, %v646
    %v755 = vpack.c.b16 %v650, %v647
    %v756 = vpack.c.b16 %v654, %v651
    %v757 = vpack.c.b16 %v655, %v652
    %v758 = vpack.c.b16 %v656, %v653
    %v759 = vpack.c.b16 %v660, %v657
    %v760 = vpack.c.b16 %v661, %v658
    %v761 = vpack.c.b16 %v662, %v659
    %v762 = vpack.c.b16 %v666, %v663
    %v763 = vpack.c.b16 %v667, %v664
    %v764 = vpack.c.b16 %v668, %v665
    %861 = vmatpush.bf16.msra.mxu0 %v690
    %862 = vmatpush.bf16.msra.mxu0 %v687
    %863 = vmatpush.bf16.msra.mxu0 %v684
    %864 = vmatpush.bf16.msra.mxu0 %v681
    %865 = vmatpush.bf16.msra.mxu0 %v678
    %866 = vmatpush.bf16.msra.mxu0 %v675
    %867 = vmatpush.bf16.msra.mxu0 %v672
    %868 = vmatpush.bf16.msra.mxu0 %v669
    %869 = vmatmul.bf16.gmra.mxu0 %v209
    %v870 = vpop.f32.mrf.mxu0
    %v871 = vadd.f32 %v343, %v870
    %v872 = vpop.f32.mrf.mxu0
    %v873 = vadd.f32 %v343, %v872
    %874 = vdwg.mxu0
    %875 = vmatpush.bf16.msra.mxu0 %v714
    %876 = vmatpush.bf16.msra.mxu0 %v711
    %877 = vmatpush.bf16.msra.mxu0 %v708
    %878 = vmatpush.bf16.msra.mxu0 %v705
    %879 = vmatpush.bf16.msra.mxu0 %v702
    %880 = vmatpush.bf16.msra.mxu0 %v699
    %881 = vmatpush.bf16.msra.mxu0 %v696
    %882 = vmatpush.bf16.msra.mxu0 %v693
    %883 = vmatmul.bf16.gmra.mxu0 %v210
    %v884 = vpop.f32.mrf.mxu0
    %v885 = vadd.f32 %v871, %v884
    %v886 = vpop.f32.mrf.mxu0
    %v887 = vadd.f32 %v873, %v886
    %888 = vdwg.mxu0
    %889 = vmatpush.bf16.msra.mxu0 %v738
    %890 = vmatpush.bf16.msra.mxu0 %v735
    %891 = vmatpush.bf16.msra.mxu0 %v732
    %892 = vmatpush.bf16.msra.mxu0 %v729
    %893 = vmatpush.bf16.msra.mxu0 %v726
    %894 = vmatpush.bf16.msra.mxu0 %v723
    %895 = vmatpush.bf16.msra.mxu0 %v720
    %896 = vmatpush.bf16.msra.mxu0 %v717
    %897 = vmatmul.bf16.gmra.mxu0 %v211
    %v898 = vpop.f32.mrf.mxu0
    %v899 = vadd.f32 %v885, %v898
    %v900 = vpop.f32.mrf.mxu0
    %v901 = vadd.f32 %v887, %v900
    %902 = vdwg.mxu0
    %903 = vmatpush.bf16.msra.mxu0 %v762
    %904 = vmatpush.bf16.msra.mxu0 %v759
    %905 = vmatpush.bf16.msra.mxu0 %v756
    %906 = vmatpush.bf16.msra.mxu0 %v753
    %907 = vmatpush.bf16.msra.mxu0 %v750
    %908 = vmatpush.bf16.msra.mxu0 %v747
    %909 = vmatpush.bf16.msra.mxu0 %v744
    %910 = vmatpush.bf16.msra.mxu0 %v741
    %911 = vmatmul.bf16.gmra.mxu0 %v212
    %v912 = vpop.f32.mrf.mxu0
    %v913 = vadd.f32 %v899, %v912
    %v914 = vpop.f32.mrf.mxu0
    %v915 = vadd.f32 %v901, %v914
    %916 = vdwg.mxu0
    %917 = vmatpush.bf16.msra.mxu0 %v691
    %918 = vmatpush.bf16.msra.mxu0 %v688
    %919 = vmatpush.bf16.msra.mxu0 %v685
    %920 = vmatpush.bf16.msra.mxu0 %v682
    %921 = vmatpush.bf16.msra.mxu0 %v679
    %922 = vmatpush.bf16.msra.mxu0 %v676
    %923 = vmatpush.bf16.msra.mxu0 %v673
    %924 = vmatpush.bf16.msra.mxu0 %v670
    %925 = vmatmul.bf16.gmra.mxu0 %v209
    %v926 = vpop.f32.mrf.mxu0
    %v927 = vadd.f32 %v344, %v926
    %v928 = vpop.f32.mrf.mxu0
    %v929 = vadd.f32 %v344, %v928
    %930 = vdwg.mxu0
    %931 = vmatpush.bf16.msra.mxu0 %v715
    %932 = vmatpush.bf16.msra.mxu0 %v712
    %933 = vmatpush.bf16.msra.mxu0 %v709
    %934 = vmatpush.bf16.msra.mxu0 %v706
    %935 = vmatpush.bf16.msra.mxu0 %v703
    %936 = vmatpush.bf16.msra.mxu0 %v700
    %937 = vmatpush.bf16.msra.mxu0 %v697
    %938 = vmatpush.bf16.msra.mxu0 %v694
    %939 = vmatmul.bf16.gmra.mxu0 %v210
    %v940 = vpop.f32.mrf.mxu0
    %v941 = vadd.f32 %v927, %v940
    %v942 = vpop.f32.mrf.mxu0
    %v943 = vadd.f32 %v929, %v942
    %944 = vdwg.mxu0
    %945 = vmatpush.bf16.msra.mxu0 %v739
    %946 = vmatpush.bf16.msra.mxu0 %v736
    %947 = vmatpush.bf16.msra.mxu0 %v733
    %948 = vmatpush.bf16.msra.mxu0 %v730
    %949 = vmatpush.bf16.msra.mxu0 %v727
    %950 = vmatpush.bf16.msra.mxu0 %v724
    %951 = vmatpush.bf16.msra.mxu0 %v721
    %952 = vmatpush.bf16.msra.mxu0 %v718
    %953 = vmatmul.bf16.gmra.mxu0 %v211
    %v954 = vpop.f32.mrf.mxu0
    %v955 = vadd.f32 %v941, %v954
    %v956 = vpop.f32.mrf.mxu0
    %v957 = vadd.f32 %v943, %v956
    %958 = vdwg.mxu0
    %959 = vmatpush.bf16.msra.mxu0 %v763
    %960 = vmatpush.bf16.msra.mxu0 %v760
    %961 = vmatpush.bf16.msra.mxu0 %v757
    %962 = vmatpush.bf16.msra.mxu0 %v754
    %963 = vmatpush.bf16.msra.mxu0 %v751
    %964 = vmatpush.bf16.msra.mxu0 %v748
    %965 = vmatpush.bf16.msra.mxu0 %v745
    %966 = vmatpush.bf16.msra.mxu0 %v742
    %967 = vmatmul.bf16.gmra.mxu0 %v212
    %v968 = vpop.f32.mrf.mxu0
    %v969 = vadd.f32 %v955, %v968
    %v970 = vpop.f32.mrf.mxu0
    %v971 = vadd.f32 %v957, %v970
    %972 = vdwg.mxu0
    %973 = vmatpush.bf16.msra.mxu0 %v692
    %974 = vmatpush.bf16.msra.mxu0 %v689
    %975 = vmatpush.bf16.msra.mxu0 %v686
    %976 = vmatpush.bf16.msra.mxu0 %v683
    %977 = vmatpush.bf16.msra.mxu0 %v680
    %978 = vmatpush.bf16.msra.mxu0 %v677
    %979 = vmatpush.bf16.msra.mxu0 %v674
    %980 = vmatpush.bf16.msra.mxu0 %v671
    %981 = vmatmul.bf16.gmra.mxu0 %v209
    %v982 = vpop.f32.mrf.mxu0
    %v983 = vadd.f32 %v345, %v982
    %v984 = vpop.f32.mrf.mxu0
    %v985 = vadd.f32 %v345, %v984
    %986 = vdwg.mxu0
    %987 = vmatpush.bf16.msra.mxu0 %v716
    %988 = vmatpush.bf16.msra.mxu0 %v713
    %989 = vmatpush.bf16.msra.mxu0 %v710
    %990 = vmatpush.bf16.msra.mxu0 %v707
    %991 = vmatpush.bf16.msra.mxu0 %v704
    %992 = vmatpush.bf16.msra.mxu0 %v701
    %993 = vmatpush.bf16.msra.mxu0 %v698
    %994 = vmatpush.bf16.msra.mxu0 %v695
    %995 = vmatmul.bf16.gmra.mxu0 %v210
    %v996 = vpop.f32.mrf.mxu0
    %v997 = vadd.f32 %v983, %v996
    %v998 = vpop.f32.mrf.mxu0
    %v999 = vadd.f32 %v985, %v998
    %1000 = vdwg.mxu0
    %1001 = vmatpush.bf16.msra.mxu0 %v740
    %1002 = vmatpush.bf16.msra.mxu0 %v737
    %1003 = vmatpush.bf16.msra.mxu0 %v734
    %1004 = vmatpush.bf16.msra.mxu0 %v731
    %1005 = vmatpush.bf16.msra.mxu0 %v728
    %1006 = vmatpush.bf16.msra.mxu0 %v725
    %1007 = vmatpush.bf16.msra.mxu0 %v722
    %1008 = vmatpush.bf16.msra.mxu0 %v719
    %1009 = vmatmul.bf16.gmra.mxu0 %v211
    %v1010 = vpop.f32.mrf.mxu0
    %v1011 = vadd.f32 %v997, %v1010
    %v1012 = vpop.f32.mrf.mxu0
    %v1013 = vadd.f32 %v999, %v1012
    %1014 = vdwg.mxu0
    %1015 = vmatpush.bf16.msra.mxu0 %v764
    %1016 = vmatpush.bf16.msra.mxu0 %v761
    %1017 = vmatpush.bf16.msra.mxu0 %v758
    %1018 = vmatpush.bf16.msra.mxu0 %v755
    %1019 = vmatpush.bf16.msra.mxu0 %v752
    %1020 = vmatpush.bf16.msra.mxu0 %v749
    %1021 = vmatpush.bf16.msra.mxu0 %v746
    %1022 = vmatpush.bf16.msra.mxu0 %v743
    %1023 = vmatmul.bf16.gmra.mxu0 %v212
    %v1024 = vpop.f32.mrf.mxu0
    %v1025 = vadd.f32 %v1011, %v1024
    %v1026 = vpop.f32.mrf.mxu0
    %v1027 = vadd.f32 %v1013, %v1026
    %1028 = vdwg.mxu0
    %v1029 = vmax.f32 %v913, 0.0
    %v1030 = vmax.f32 %v969, 0.0
    %v1031 = vmax.f32 %v1025, 0.0
    %v1032 = vmax.f32 %v915, 0.0
    %v1033 = vmax.f32 %v971, 0.0
    %v1034 = vmax.f32 %v1027, 0.0
    %v1035 = vpack.c.bf16 %v1032, %v1029
    %v1036 = vpack.c.bf16 %v1033, %v1030
    %v1037 = vpack.c.bf16 %v1034, %v1031
    %v1038 = vld [vmem:[#allocation10] sm:$0xf]
    %v1039 = vld [vmem:[#allocation10 + $0x4] sm:$0xf]
    %v1040 = vld [vmem:[#allocation10 + $0x8] sm:$0xf]
    %v1041 = vld [vmem:[#allocation10 + $0xc] sm:$0xf]
    %v1042 = vld [vmem:[#allocation10 + $0x10] sm:$0xf]
    %v1043 = vld [vmem:[#allocation10 + $0x14] sm:$0xf]
    %v1044 = vld [vmem:[#allocation10 + $0x18] sm:$0xf]
    %v1045 = vld [vmem:[#allocation10 + $0x1c] sm:$0xf]
    %v1046 = vld [vmem:[#allocation10 + $0x20] sm:$0xf]
    %v1047 = vld [vmem:[#allocation10 + $0x24] sm:$0xf]
    %v1048 = vld [vmem:[#allocation10 + $0x28] sm:$0xf]
    %v1049 = vld [vmem:[#allocation10 + $0x2c] sm:$0xf]
    %v1050 = vld [vmem:[#allocation10 + $0x30] sm:$0xf]
    %v1051 = vld [vmem:[#allocation10 + $0x34] sm:$0xf]
    %v1052 = vld [vmem:[#allocation10 + $0x38] sm:$0xf]
    %v1053 = vld [vmem:[#allocation10 + $0x3c] sm:$0xf]
    %v1054 = vld [vmem:[#allocation10 + $0x40] sm:$0xf]
    %v1055 = vld [vmem:[#allocation10 + $0x44] sm:$0xf]
    %v1056 = vld [vmem:[#allocation10 + $0x48] sm:$0xf]
    %v1057 = vld [vmem:[#allocation10 + $0x4c] sm:$0xf]
    %v1058 = vld [vmem:[#allocation10 + $0x50] sm:$0xf]
    %v1059 = vld [vmem:[#allocation10 + $0x54] sm:$0xf]
    %v1060 = vld [vmem:[#allocation10 + $0x58] sm:$0xf]
    %v1061 = vld [vmem:[#allocation10 + $0x5c] sm:$0xf]
    %v1062 = vld [vmem:[#allocation10 + $0x60] sm:$0xf]
    %v1063 = vld [vmem:[#allocation10 + $0x64] sm:$0xf]
    %v1064 = vld [vmem:[#allocation10 + $0x68] sm:$0xf]
    %v1065 = vld [vmem:[#allocation10 + $0x6c] sm:$0xf]
    %v1066 = vld [vmem:[#allocation10 + $0x70] sm:$0xf]
    %v1067 = vld [vmem:[#allocation10 + $0x74] sm:$0xf]
    %v1068 = vld [vmem:[#allocation10 + $0x78] sm:$0xf]
    %v1069 = vld [vmem:[#allocation10 + $0x7c] sm:$0xf]
    %v1070 = vld [vmem:[#allocation10 + $0x80] sm:$0xf]
    %v1071 = vld [vmem:[#allocation10 + $0x84] sm:$0xf]
    %v1072 = vld [vmem:[#allocation10 + $0x88] sm:$0xf]
    %v1073 = vld [vmem:[#allocation10 + $0x8c] sm:$0xf]
    %v1074 = vld [vmem:[#allocation10 + $0x90] sm:$0xf]
    %v1075 = vld [vmem:[#allocation10 + $0x94] sm:$0xf]
    %v1076 = vld [vmem:[#allocation10 + $0x98] sm:$0xf]
    %v1077 = vld [vmem:[#allocation10 + $0x9c] sm:$0xf]
    %v1078 = vld [vmem:[#allocation10 + $0xa0] sm:$0xf]
    %v1079 = vld [vmem:[#allocation10 + $0xa4] sm:$0xf]
    %v1080 = vld [vmem:[#allocation10 + $0xa8] sm:$0xf]
    %v1081 = vld [vmem:[#allocation10 + $0xac] sm:$0xf]
    %v1082 = vld [vmem:[#allocation10 + $0xb0] sm:$0xf]
    %v1083 = vld [vmem:[#allocation10 + $0xb4] sm:$0xf]
    %v1084 = vld [vmem:[#allocation10 + $0xb8] sm:$0xf]
    %v1085 = vld [vmem:[#allocation10 + $0xbc] sm:$0xf]
    %v1086 = vld [vmem:[%s6] sm:$0x1]
    %v1088 = vperm.slane %v1086, 0
    %v1138 = vunpack.c.l.b16 %v1038
    %v1139 = vunpack.c.l.b16 %v1039
    %v1140 = vunpack.c.l.b16 %v1040
    %v1141 = vunpack.c.l.b16 %v1041
    %v1142 = vunpack.c.l.b16 %v1042
    %v1143 = vunpack.c.l.b16 %v1043
    %v1144 = vunpack.c.l.b16 %v1044
    %v1145 = vunpack.c.l.b16 %v1045
    %v1146 = vunpack.c.l.b16 %v1046
    %v1147 = vunpack.c.l.b16 %v1047
    %v1148 = vunpack.c.l.b16 %v1048
    %v1149 = vunpack.c.l.b16 %v1049
    %v1150 = vunpack.c.l.b16 %v1050
    %v1151 = vunpack.c.l.b16 %v1051
    %v1152 = vunpack.c.l.b16 %v1052
    %v1153 = vunpack.c.l.b16 %v1053
    %v1154 = vunpack.c.l.b16 %v1054
    %v1155 = vunpack.c.l.b16 %v1055
    %v1156 = vunpack.c.l.b16 %v1056
    %v1157 = vunpack.c.l.b16 %v1057
    %v1158 = vunpack.c.l.b16 %v1058
    %v1159 = vunpack.c.l.b16 %v1059
    %v1160 = vunpack.c.l.b16 %v1060
    %v1161 = vunpack.c.l.b16 %v1061
    %v1162 = vunpack.c.l.b16 %v1062
    %v1163 = vunpack.c.l.b16 %v1063
    %v1164 = vunpack.c.l.b16 %v1064
    %v1165 = vunpack.c.l.b16 %v1065
    %v1166 = vunpack.c.l.b16 %v1066
    %v1167 = vunpack.c.l.b16 %v1067
    %v1168 = vunpack.c.l.b16 %v1068
    %v1169 = vunpack.c.l.b16 %v1069
    %v1170 = vunpack.c.l.b16 %v1070
    %v1171 = vunpack.c.l.b16 %v1071
    %v1172 = vunpack.c.l.b16 %v1072
    %v1173 = vunpack.c.l.b16 %v1073
    %v1174 = vunpack.c.l.b16 %v1074
    %v1175 = vunpack.c.l.b16 %v1075
    %v1176 = vunpack.c.l.b16 %v1076
    %v1177 = vunpack.c.l.b16 %v1077
    %v1178 = vunpack.c.l.b16 %v1078
    %v1179 = vunpack.c.l.b16 %v1079
    %v1180 = vunpack.c.l.b16 %v1080
    %v1181 = vunpack.c.l.b16 %v1081
    %v1182 = vunpack.c.l.b16 %v1082
    %v1183 = vunpack.c.l.b16 %v1083
    %v1184 = vunpack.c.l.b16 %v1084
    %v1185 = vunpack.c.l.b16 %v1085
    %v1186 = vpack.c.b16 %v1139, %v1138
    %v1187 = vpack.c.b16 %v1141, %v1140
    %v1188 = vpack.c.b16 %v1143, %v1142
    %v1189 = vpack.c.b16 %v1145, %v1144
    %v1190 = vpack.c.b16 %v1147, %v1146
    %v1191 = vpack.c.b16 %v1149, %v1148
    %v1192 = vpack.c.b16 %v1151, %v1150
    %v1193 = vpack.c.b16 %v1153, %v1152
    %v1194 = vpack.c.b16 %v1155, %v1154
    %v1195 = vpack.c.b16 %v1157, %v1156
    %v1196 = vpack.c.b16 %v1159, %v1158
    %v1197 = vpack.c.b16 %v1161, %v1160
    %v1198 = vpack.c.b16 %v1163, %v1162
    %v1199 = vpack.c.b16 %v1165, %v1164
    %v1200 = vpack.c.b16 %v1167, %v1166
    %v1201 = vpack.c.b16 %v1169, %v1168
    %v1202 = vpack.c.b16 %v1171, %v1170
    %v1203 = vpack.c.b16 %v1173, %v1172
    %v1204 = vpack.c.b16 %v1175, %v1174
    %v1205 = vpack.c.b16 %v1177, %v1176
    %v1206 = vpack.c.b16 %v1179, %v1178
    %v1207 = vpack.c.b16 %v1181, %v1180
    %v1208 = vpack.c.b16 %v1183, %v1182
    %v1209 = vpack.c.b16 %v1185, %v1184
    %1234 = vmatpush.bf16.msra.mxu0 %v1193
    %1235 = vmatpush.bf16.msra.mxu0 %v1192
    %1236 = vmatpush.bf16.msra.mxu0 %v1191
    %1237 = vmatpush.bf16.msra.mxu0 %v1190
    %1238 = vmatpush.bf16.msra.mxu0 %v1189
    %1239 = vmatpush.bf16.msra.mxu0 %v1188
    %1240 = vmatpush.bf16.msra.mxu0 %v1187
    %1241 = vmatpush.bf16.msra.mxu0 %v1186
    %1242 = vmatmul.bf16.gmra.mxu0 %v1035
    %v1243 = vpop.f32.mrf.mxu0
    %v1244 = vadd.f32 %v1088, %v1243
    %v1245 = vpop.f32.mrf.mxu0
    %v1246 = vadd.f32 %v1088, %v1245
    %1247 = vdwg.mxu0
    %1248 = vmatpush.bf16.msra.mxu0 %v1201
    %1249 = vmatpush.bf16.msra.mxu0 %v1200
    %1250 = vmatpush.bf16.msra.mxu0 %v1199
    %1251 = vmatpush.bf16.msra.mxu0 %v1198
    %1252 = vmatpush.bf16.msra.mxu0 %v1197
    %1253 = vmatpush.bf16.msra.mxu0 %v1196
    %1254 = vmatpush.bf16.msra.mxu0 %v1195
    %1255 = vmatpush.bf16.msra.mxu0 %v1194
    %1256 = vmatmul.bf16.gmra.mxu0 %v1036
    %v1257 = vpop.f32.mrf.mxu0
    %v1258 = vadd.f32 %v1244, %v1257
    %v1259 = vpop.f32.mrf.mxu0
    %v1260 = vadd.f32 %v1246, %v1259
    %1261 = vdwg.mxu0
    %1262 = vmatpush.bf16.msra.mxu0 %v1209
    %1263 = vmatpush.bf16.msra.mxu0 %v1208
    %1264 = vmatpush.bf16.msra.mxu0 %v1207
    %1265 = vmatpush.bf16.msra.mxu0 %v1206
    %1266 = vmatpush.bf16.msra.mxu0 %v1205
    %1267 = vmatpush.bf16.msra.mxu0 %v1204
    %1268 = vmatpush.bf16.msra.mxu0 %v1203
    %1269 = vmatpush.bf16.msra.mxu0 %v1202
    %1270 = vmatmul.bf16.gmra.mxu0 %v1037
    %v1271 = vpop.f32.mrf.mxu0
    %v1272 = vadd.f32 %v1258, %v1271
    %v1273 = vpop.f32.mrf.mxu0
    %v1274 = vadd.f32 %v1260, %v1273
    %1275 = vdwg.mxu0
    %v1276 = vtanh.pop %v1272
    %v1277 = vtanh.pop %v1274
    %v1278 = vmul.f32 %v1276, 2.0
    %v1279 = vmul.f32 %v1277, 2.0
    %v1280 = vpack.c.bf16 %v1278, %v1278
    %v1281 = vpack.c.bf16 %v1279, %v1279
    %1282 = vst [vmem:[#allocation11] sm:$0xf] %v1280
    %1283 = vst [vmem:[#allocation11 + $0x4] sm:$0xf] %v1281
    // Predicated region
    $region50: #{tpu_custom_call.1} parent=1 // pred_check
      _
    $region51: #{tpu_custom_call.1} parent=1 // pred_check_branch
      %1285 = sbr.rel (0) target = $region53
    $region52: #{tpu_custom_call.1} parent=1 // pred_region
      %1287 = vsyncadd [#allocation4], 0
      %s1288 = sshll.u32 [#allocation11], 4
      %s1289 = int_to_ptr.vmem [resolvable:$true] %s1288
      %s1290 = sshll.u32 %s7, 4
      %s1291 = int_to_ptr.hbm [resolvable:$true] %s1290
      %1296 = dma.vmem_to_hbm [thread:$0]  %s1289, 128, %s1291, [#allocation4], 64, 64, 4
    $region53: #{tpu_custom_call.1} parent=1 // pred_fallthru
      _
    // Predicated region
    $region54: #{tpu_custom_call.1} parent=1 // pred_check
      _
    $region55: #{tpu_custom_call.1} parent=1 // pred_check_branch
      %1298 = sbr.rel (0) target = $region57
    $region56: #{tpu_custom_call.1} parent=1 // pred_region
      %1300 = dma.done [#allocation4], 128
    $region57: #{tpu_custom_call.1} parent=1 // pred_fallthru
      _
    %1301 = vsyncpa [#allocation3], 1
    %1302 = vsyncpa [#allocation6], 1
    %1303 = vsyncpa [#allocation9], 1
    %1304 = vsyncpa [#allocation4], 1

</llo_original>
